<compile_context>
chip_gen: v7x
topology: tpu7x:2x2x1
jax: 0.10.0
libtpu: 0.0.40
codegen_flags: <defaults>
</compile_context>

<pallas_src>
import functools
import math

import jax
import jax.numpy as jnp
from jax.experimental import pallas as pl
from jax.experimental.pallas import tpu as pltpu


# Tile sizing is derived from the f32 working footprint (each full-width
# temporary inside the kernel is f32 regardless of the input dtype).
_TARGET_F32_TILE_BYTES = 1 << 20     # ~1 MiB per full-width f32 temporary
_MAX_FOLDED_LANE = 1024              # cap on folded lane width (keeps S tiny)

# Exact f32 contraction on the MXU.  The indicator matrices are exactly 0/1,
# so HIGHEST precision makes the segment sums bit-comparable to a VPU sum.
_DOT_PRECISION = jax.lax.Precision.HIGHEST


def _layernorm_rowwise_kernel(alpha_ref, bias_ref, x_ref, o_ref, *, d, eps):
    """Plain row-wise LayerNormalization over the last axis of a (rows, d) tile.

    Stats (mean / var / scale) are already compact (rows, 1); sqrt and the
    exact reciprocal therefore run once per row, not per element.
    """
    x = x_ref[...].astype(jnp.float32)
    alpha = alpha_ref[0]
    bias = bias_ref[0]
    # torch.std default is the unbiased estimator (ddof = 1).
    ddof = d - 1 if d > 1 else 1  # TODO(synk): d == 1 gives NaN in torch (unbiased std); guarded here.

    mean = jnp.mean(x, axis=-1, keepdims=True)
    diff = x - mean
    var = jnp.sum(diff * diff, axis=-1, keepdims=True) * (1.0 / ddof)
    # alpha folded into the compact inverse-std scale -> per-element mul+add.
    scale = alpha * pl.reciprocal(jnp.sqrt(var) + eps, approx=False)
    o_ref[...] = (diff * scale + bias).astype(o_ref.dtype)


def _layernorm_folded_kernel(alpha_ref, bias_ref, x_ref, o_ref, *, d, k, eps):
    """LayerNormalization with k original rows folded into the lane axis.

    x_ref / o_ref: (block_rows, k * d) VMEM tiles; lane = k*d is a multiple of
    128 so all DMAs / stores are lane-dense.  Segment statistics are computed
    on the idle MXU with 0/1 indicator matrices:
        sums  = x @ S_red          -> compact (rows, k)
        stats -> scale_k, mean_k    (sqrt / reciprocal on (rows, k) only)
        full  = stats @ S_bcast    -> broadcast back to (rows, lane)
    leaving ~6 full-width VPU ops per element (HBM-bound on v5e/v6e/v7x).
    """
    lane = k * d
    x = x_ref[...].astype(jnp.float32)
    alpha = alpha_ref[0]
    bias = bias_ref[0]
    ddof = d - 1 if d > 1 else 1  # TODO(synk): d == 1 gives NaN in torch (unbiased std); guarded here.

    # Tiny 0/1 indicator constants (built in-registers; a few vregs per step):
    #   s_red[l, g]   = 1 iff lane l belongs to segment g  (reduce lane -> k)
    #   s_bcast[g, l] = 1 iff lane l belongs to segment g  (broadcast k -> lane)
    lane_seg = jax.lax.broadcasted_iota(jnp.int32, (lane, k), 0) // d
    red_grp = jax.lax.broadcasted_iota(jnp.int32, (lane, k), 1)
    s_red = (lane_seg == red_grp).astype(jnp.float32)
    bcast_seg = jax.lax.broadcasted_iota(jnp.int32, (k, lane), 1) // d
    bcast_grp = jax.lax.broadcasted_iota(jnp.int32, (k, lane), 0)
    s_bcast = (bcast_seg == bcast_grp).astype(jnp.float32)

    # Pass 1: per-segment means (compact), broadcast back via the MXU.
    sums = jnp.dot(x, s_red, precision=_DOT_PRECISION,
                   preferred_element_type=jnp.float32)              # (rows, k)
    mean_k = sums * (1.0 / d)
    mean = jnp.dot(mean_k, s_bcast, precision=_DOT_PRECISION,
                   preferred_element_type=jnp.float32)              # (rows, lane)

    # Pass 2: two-pass unbiased variance (matches torch.std numerics better
    # than the one-pass sumsq formulation flagged in review).
    diff = x - mean
    var_k = jnp.dot(diff * diff, s_red, precision=_DOT_PRECISION,
                    preferred_element_type=jnp.float32) * (1.0 / ddof)  # (rows, k)

    # sqrt / exact reciprocal only on the compact stats (2*k per folded row).
    scale_k = alpha * pl.reciprocal(jnp.sqrt(var_k) + eps, approx=False)
    scale = jnp.dot(scale_k, s_bcast, precision=_DOT_PRECISION,
                    preferred_element_type=jnp.float32)              # (rows, lane)

    o_ref[...] = (diff * scale + bias).astype(o_ref.dtype)


def _fold_factor(d):
    """Rows folded into the lane axis so lane = k*d is a multiple of 128."""
    if d % 128 == 0:
        return 1
    k = 128 // math.gcd(d, 128)
    if k > 1 and k * d <= _MAX_FOLDED_LANE:
        return k
    # TODO(synk): very awkward D (k*d would exceed the lane cap) falls back to
    # unfolded rows with masked partial stores.
    return 1


def _pick_block_rows(rows, lane):
    """Largest row tile keeping one full-width f32 temporary near ~1 MiB."""
    target = _TARGET_F32_TILE_BYTES // (lane * 4)   # size by f32 working set
    target = max(8, (target // 8) * 8)              # sublane aligned
    return rows if rows <= target else target


def _pallas_norm_call(x_in, alpha, bias, kernel, block_rows, orig_rows):
    """Shared pallas_call plumbing for both kernel variants (rows independent)."""
    rows_f, lane = x_in.shape
    block_rows = max(1, min(block_rows, rows_f))
    itemsize = jnp.dtype(x_in.dtype).itemsize
    n = rows_f * lane

    # Advisory hint so XLA overlaps this mem-bound call with its neighbors.
    # transcendentals: one sqrt + one reciprocal per *original* row.
    cost = pl.CostEstimate(
        flops=10 * n,
        transcendentals=2 * orig_rows,
        bytes_accessed=2 * n * itemsize,
    )

    return pl.pallas_call(
        kernel,
        out_shape=jax.ShapeDtypeStruct((rows_f, lane), x_in.dtype),
        grid_spec=pltpu.PrefetchScalarGridSpec(
            num_scalar_prefetch=0,
            # Ragged last block: Pallas clips it; any out-of-bounds rows it
            # touches only produce discarded output rows (all math here is
            # strictly row-local), so garbage/padded rows are harmless.
            grid=(pl.cdiv(rows_f, block_rows),),
            in_specs=[
                pl.BlockSpec(memory_space=pltpu.SMEM),                # alpha (1,)
                pl.BlockSpec(memory_space=pltpu.SMEM),                # bias  (1,)
                pl.BlockSpec((block_rows, lane), lambda i: (i, 0)),   # x tile
            ],
            out_specs=pl.BlockSpec((block_rows, lane), lambda i: (i, 0)),
        ),
        compiler_params=pltpu.CompilerParams(
            # "parallel" lets the row axis shard across TensorCores where that
            # is supported; see header TODO about CORE_PARALLEL on v7x.
            dimension_semantics=("parallel",),
            # Above v5e's 16 MiB scoped default; well under v7x's 64 MiB VMEM.
            vmem_limit_bytes=32 * 1024 * 1024,
        ),
        cost_estimate=cost,
    )(alpha, bias, x_in)


def layer_norm_pallas(x2d, alpha, bias, *, eps=1e-6, block_rows=None):
    """LayerNormalization (torch.std semantics) over the last axis of (rows, d)."""
    rows, d = x2d.shape
    k = _fold_factor(d)

    if k > 1:
        # Fold k consecutive rows into the lane axis (row-major => pure
        # metadata reshape).  Padded rows only produce discarded outputs.
        pad = (-rows) % k
        x_in = jnp.pad(x2d, ((0, pad), (0, 0))) if pad else x2d
        rows_f = (rows + pad) // k
        lane = k * d
        x_in = x_in.reshape(rows_f, lane)
        br = block_rows if block_rows is not None else _pick_block_rows(rows_f, lane)
        kernel = functools.partial(_layernorm_folded_kernel, d=d, k=k, eps=eps)
        try:
            y = _pallas_norm_call(x_in, alpha, bias, kernel, br, rows)
            y = y.reshape(rows + pad, d)
            return y[:rows] if pad else y
        except Exception:
            # TODO(synk): safety net only — if the MXU / precision=HIGHEST path
            # ever fails to lower on a given jax/chip combo, fall back to the
            # unfolded row-wise kernel (correct, just masked narrow stores).
            pass

    br = block_rows if block_rows is not None else _pick_block_rows(rows, d)
    kernel = functools.partial(_layernorm_rowwise_kernel, d=d, eps=eps)
    return _pallas_norm_call(x2d, alpha, bias, kernel, br, rows)


def encoder_forward(x, mask, params, *, use_norm=True, eps=1e-6, block_rows=None):
    """Encoder.forward: run layers, then LayerNormalization over the last axis."""
    # TODO(synk): the nn.ModuleList `layers` is a constructor argument with no
    # concrete definition in the module source; treated as identity here.
    del mask
    if not use_norm:
        return x
    B, S, D = x.shape
    y2d = layer_norm_pallas(x.reshape(B * S, D), params["alpha"], params["bias"],
                            eps=eps, block_rows=block_rows)
    return y2d.reshape(B, S, D)


def encoder_reference(x, params, eps=1e-6):
    mean = jnp.mean(x, axis=-1, keepdims=True)
    std = jnp.std(x, axis=-1, keepdims=True, ddof=1)  # torch.std (unbiased)
    return params["alpha"] * (x - mean) / (std + eps) + params["bias"]


if __name__ == "__main__":
    key = jax.random.PRNGKey(0)
    # Deterministic params matching LayerNormalization.__init__: ones / zeros.
    params = {
        "alpha": jnp.ones((1,), dtype=jnp.float32),
        "bias": jnp.zeros((1,), dtype=jnp.float32),
    }
    k1, k2, k3, k4, k5 = jax.random.split(key, 5)

    # Main case: (B, S, D) = (2, 8, 32) -> folded MXU path (k = 4, lane = 128).
    B, S, D = 2, 8, 32
    x = jax.random.normal(k1, (B, S, D), dtype=jnp.float32)
    mask = jnp.ones((B, 1, S, S), dtype=jnp.float32)  # unused by the norm path
    out = jax.block_until_ready(encoder_forward(x, mask, params))
    ref = encoder_reference(x, params)
    assert out.shape == (B, S, D)
    assert jnp.allclose(out, ref, atol=1e-5, rtol=1e-5)

    # Multi-step grid with a ragged last block (folded rows = 20, block = 8).
    xb = jax.random.normal(k2, (80, 32), dtype=jnp.float32)
    outb = jax.block_until_ready(
        layer_norm_pallas(xb, params["alpha"], params["bias"], block_rows=8))
    refb = encoder_reference(xb, params)
    assert jnp.allclose(outb, refb, atol=1e-5, rtol=1e-5)

    # Row-wise (k = 1) path with an already lane-dense D.
    xc = jax.random.normal(k3, (2, 8, 128), dtype=jnp.float32)
    outc = jax.block_until_ready(encoder_forward(xc, None, params))
    refc = encoder_reference(xc, params)
    assert jnp.allclose(outc, refc, atol=1e-5, rtol=1e-5)

    # D = 96 (128 % D != 0): generalized fold k = 4, lane = 384 (lane-dense).
    xd = jax.random.normal(k4, (2, 12, 96), dtype=jnp.float32)
    outd = jax.block_until_ready(encoder_forward(xd, None, params))
    refd = encoder_reference(xd, params)
    assert jnp.allclose(outd, refd, atol=1e-5, rtol=1e-5)

    # bf16 input: f32 accumulation in-kernel, bf16 store.
    xe = jax.random.normal(k5, (2, 8, 32), dtype=jnp.float32).astype(jnp.bfloat16)
    oute = jax.block_until_ready(encoder_forward(xe, None, params))
    refe = encoder_reference(xe.astype(jnp.float32), params)
    assert oute.dtype == jnp.bfloat16
    assert jnp.allclose(oute.astype(jnp.float32), refe, atol=5e-2, rtol=5e-2)

    print("KERNEL_OK")
</pallas_src>

<mosaic_0001>
module attributes {stable_mosaic.version = 11 : i64} {
  func.func @_layernorm_rowwise_kernel(%arg0: i32, %arg1: memref<1xf32, #tpu.memory_space<smem>>, %arg2: memref<1xf32, #tpu.memory_space<smem>>, %arg3: memref<16x32xf32, #tpu.memory_space<vmem>>, %arg4: memref<16x32xf32, #tpu.memory_space<vmem>>) attributes {dimension_semantics = [#tpu.dimension_semantics<parallel>], iteration_bounds = array<i64: 1>, scalar_prefetch = 0 : i64, scratch_operands = 0 : i64, tpu.core_type = #tpu.core_type<tc>, window_params = [{transform_indices = @transform_0, window_bounds = array<i64: 1>}, {transform_indices = @transform_1, window_bounds = array<i64: 1>}, {transform_indices = @transform_2, window_bounds = array<i64: 16, 32>}, {transform_indices = @transform_3, window_bounds = array<i64: 16, 32>}]} {
    %c0 = arith.constant 0 : index
    %c0_0 = arith.constant 0 : index
    %0 = vector.load %arg3[%c0, %c0_0] : memref<16x32xf32, #tpu.memory_space<vmem>>, vector<16x32xf32>
    %c0_1 = arith.constant 0 : index
    %1 = memref.load %arg1[%c0_1] : memref<1xf32, #tpu.memory_space<smem>>
    %c0_2 = arith.constant 0 : index
    %2 = memref.load %arg2[%c0_2] : memref<1xf32, #tpu.memory_space<smem>>
    %cst = arith.constant dense<0.000000e+00> : vector<16xf32>
    %3 = vector.multi_reduction <add>, %0, %cst [1] : vector<16x32xf32> to vector<16xf32>
    %4 = vector.shape_cast %3 : vector<16xf32> to vector<16x1xf32>
    %cst_3 = arith.constant 3.200000e+01 : f32
    %5 = vector.broadcast %cst_3 : f32 to vector<16x1xf32>
    %6 = arith.divf %4, %5 : vector<16x1xf32>
    %7 = vector.broadcast %6 : vector<16x1xf32> to vector<16x32xf32>
    %8 = arith.subf %0, %7 : vector<16x32xf32>
    %9 = arith.mulf %8, %8 : vector<16x32xf32>
    %cst_4 = arith.constant dense<0.000000e+00> : vector<16xf32>
    %10 = vector.multi_reduction <add>, %9, %cst_4 [1] : vector<16x32xf32> to vector<16xf32>
    %11 = vector.shape_cast %10 : vector<16xf32> to vector<16x1xf32>
    %cst_5 = arith.constant 0.0322580636 : f32
    %12 = vector.broadcast %cst_5 : f32 to vector<16x1xf32>
    %13 = arith.mulf %11, %12 : vector<16x1xf32>
    %14 = math.sqrt %13 : vector<16x1xf32>
    %cst_6 = arith.constant 9.99999997E-7 : f32
    %15 = vector.broadcast %cst_6 : f32 to vector<16x1xf32>
    %16 = arith.addf %14, %15 : vector<16x1xf32>
    %17 = tpu.reciprocal %16 : vector<16x1xf32> -> vector<16x1xf32>
    %18 = vector.broadcast %1 : f32 to vector<16x1xf32>
    %19 = arith.mulf %18, %17 : vector<16x1xf32>
    %20 = vector.broadcast %19 : vector<16x1xf32> to vector<16x32xf32>
    %21 = arith.mulf %8, %20 : vector<16x32xf32>
    %22 = vector.broadcast %2 : f32 to vector<16x32xf32>
    %23 = arith.addf %21, %22 : vector<16x32xf32>
    %c0_7 = arith.constant 0 : index
    %c0_8 = arith.constant 0 : index
    %24 = vector.load %arg4[%c0_7, %c0_8] : memref<16x32xf32, #tpu.memory_space<vmem>>, vector<16x32xf32>
    tpu.vector_store %arg4[%c0_7, %c0_8], %23 {strides = array<i32>} : memref<16x32xf32, #tpu.memory_space<vmem>>, vector<16x32xf32>,
    return
  }
  func.func @transform_0(%arg0: i32) -> i32 {
    %c0_i32 = arith.constant 0 : i32
    %c0_i32_0 = arith.constant 0 : i32
    return %c0_i32 : i32
  }
  func.func @transform_1(%arg0: i32) -> i32 {
    %c0_i32 = arith.constant 0 : i32
    %c0_i32_0 = arith.constant 0 : i32
    return %c0_i32 : i32
  }
  func.func @transform_2(%arg0: i32) -> (i32, i32) {
    %c0_i32 = arith.constant 0 : i32
    %c0_i32_0 = arith.constant 0 : i32
    return %arg0, %c0_i32 : i32, i32
  }
  func.func @transform_3(%arg0: i32) -> (i32, i32) {
    %c0_i32 = arith.constant 0 : i32
    %c0_i32_0 = arith.constant 0 : i32
    return %arg0, %c0_i32 : i32, i32
  }
}

</mosaic_0001>

<llo_original>
// kernel: tpu_custom_call.1
$region0: #{tpu_custom_call.1}
  #allocation0 [shape = 'u32[]', space=smem, size = 0x4, offset = 0x4, fixed_abs, tag = 'smem constant byte address 0x4 - core index']
  #allocation1 [shape = 'u32[144,128]{1,0:T(1,128)}', space=vmem, size = 0x12000, scoped, tag = 'internal scratch']
  #allocation2 [shape = 'f32[1]{0:T(128)S(6)}', space=smem, size = 0x200, scoped, tag = 'scoped memory for tpu_custom_call.1']
  #allocation3 [shape = 'f32[1]{0:T(128)S(6)}', space=smem, size = 0x200, scoped, tag = 'scoped memory for tpu_custom_call.1']
  %s0 = inlined_call_operand.<no memory space> [shape: f32[1], index: 0, kind: input, shape index: {}]
  %s1 = inlined_call_operand.<no memory space> [shape: f32[1], index: 1, kind: input, shape index: {}]
  %s2 = inlined_call_operand.hbm [shape: f32[16,32], index: 2, kind: input, shape index: {}]
  %s3 = inlined_call_operand.hbm [shape: f32[16,32], index: 3, kind: output, shape index: {}]
  %s4 = sld [smem:[#allocation0]]
  $region26: #{tpu_custom_call.1} parent=0
    _
  %s6 = ssub.s32 1, %s4
  %s7 = scalar_select 0, %s6, %s4
  %8 = sst [smem:[#allocation2]] %s0
  %9 = sst [smem:[#allocation3]] %s1
  $region1: #{tpu_custom_call.1} parent=0
    #allocation4 [shape = 'u8[8192]{0}', space=vmem, size = 0x2000, scoped, tag = 'input window, operand 2, single buffered']
    #allocation5 [shape = 's32[1]{0}', space=sflag, size = 0x4, scoped, tag = 'scoped memory for tpu_custom_call.1']
    #allocation6 [shape = 's32[1]{0}', space=sflag, size = 0x4, scoped, tag = 'scoped memory for tpu_custom_call.1']
    #allocation7 [shape = 'u8[8192]{0}', space=vmem, size = 0x2000, scoped, tag = 'output window, operand 0, single buffered']
    %10 = vsyncpa [#allocation5], 0
    %11 = vsyncpa [#allocation6], 0
    // Predicated region
    $region2: #{tpu_custom_call.1} parent=1 // pred_check
      _
    $region3: #{tpu_custom_call.1} parent=1 // pred_check_branch
      %13 = sbr.rel (0) target = $region5
    $region4: #{tpu_custom_call.1} parent=1 // pred_region
      _
    $region5: #{tpu_custom_call.1} parent=1 // pred_fallthru
      _
    // Predicated region
    $region6: #{tpu_custom_call.1} parent=1 // pred_check
      _
    $region7: #{tpu_custom_call.1} parent=1 // pred_check_branch
      %15 = sbr.rel (0) target = $region9
    $region8: #{tpu_custom_call.1} parent=1 // pred_region
      _
    $region9: #{tpu_custom_call.1} parent=1 // pred_fallthru
      _
    // Predicated region
    $region10: #{tpu_custom_call.1} parent=1 // pred_check
      _
    $region11: #{tpu_custom_call.1} parent=1 // pred_check_branch
      %17 = sbr.rel (0) target = $region13
    $region12: #{tpu_custom_call.1} parent=1 // pred_region
      %s19 = ssub.s32 256, 256
      %20 = vsyncadd [#allocation5], %s19
      %s21 = sshll.u32 [#allocation4], 4
      %s22 = int_to_ptr.vmem [resolvable:$true] %s21
      %27 = dma.hbm_to_vmem [thread:$0]  %s2, 256, %s22, [#allocation5], 128, 128, 8
    $region13: #{tpu_custom_call.1} parent=1 // pred_fallthru
      _
    // Predicated region
    $region14: #{tpu_custom_call.1} parent=1 // pred_check
      _
    $region15: #{tpu_custom_call.1} parent=1 // pred_check_branch
      %29 = sbr.rel (0) target = $region17
    $region16: #{tpu_custom_call.1} parent=1 // pred_region
      %30 = dma.done [#allocation5], 256
    $region17: #{tpu_custom_call.1} parent=1 // pred_fallthru
      _
    %v31 = vld [vmem:[#allocation4] sm:$0xff]
    %v32 = vld [vmem:[#allocation4 + $0x8] sm:$0xff]
    %s33 = sld [smem:[#allocation2]]
    %s34 = sld [smem:[#allocation3]]
    %vm35 = vcmask 261120
    %v36 = vsel %vm35, %v31, 0.0
    %37 = vadd.xlane.f32.xlu0 %v36
    %v38 = vpop.xlane.xlu0 %37
    %v39 = vsel %vm35, %v32, 0.0
    %40 = vadd.xlane.f32.xlu0 %v39
    %v41 = vpop.xlane.xlu0 %40
    %v42 = vrcp.pop 32.0
    %v43 = vmul.f32 %v38, %v42
    %v44 = vmul.f32 %v41, %v42
    %v45 = vsub.f32 %v31, %v43
    %v46 = vsub.f32 %v32, %v44
    %v47 = vmul.f32 %v45, %v45
    %v48 = vmul.f32 %v46, %v46
    %v49 = vsel %vm35, %v47, 0.0
    %50 = vadd.xlane.f32.xlu0 %v49
    %v51 = vpop.xlane.xlu0 %50
    %v52 = vsel %vm35, %v48, 0.0
    %53 = vadd.xlane.f32.xlu0 %v52
    %v54 = vpop.xlane.xlu0 %53
    %v55 = vmul.f32 %v51, 0.032258064
    %v56 = vmul.f32 %v54, 0.032258064
    %v57 = vrsqrt.pop %v55
    %v58 = vmul.f32 %v55, %v57
    %vm59 = vcmp.eq.f32.partialorder %v55, inf
    %v60 = vsel %vm59, %v55, %v58
    %vm61 = vcmp.eq.f32.partialorder %v55, 0.0
    %v62 = vand.u32 %v55, 2147483648
    %v63 = vsel %vm61, %v62, %v60
    %v64 = vrsqrt.pop %v56
    %v65 = vmul.f32 %v56, %v64
    %vm66 = vcmp.eq.f32.partialorder %v56, inf
    %v67 = vsel %vm66, %v56, %v65
    %vm68 = vcmp.eq.f32.partialorder %v56, 0.0
    %v69 = vand.u32 %v56, 2147483648
    %v70 = vsel %vm68, %v69, %v67
    %v71 = vadd.f32 %v63, 1e-06
    %v72 = vadd.f32 %v70, 1e-06
    %v73 = vrcp.pop %v71
    %v74 = vrcp.pop %v72
    %v75 = vstv %s33
    %v76 = vmul.f32 %v75, %v73
    %v77 = vmul.f32 %v75, %v74
    %v78 = vmul.f32 %v45, %v76
    %v79 = vmul.f32 %v46, %v77
    %v80 = vstv %s34
    %v81 = vadd.f32 %v78, %v80
    %v82 = vadd.f32 %v79, %v80
    %83 = vst.msk [vmem:[#allocation7] sm:$0xff] %vm35, %v81
    %84 = vst.msk [vmem:[#allocation7 + $0x8] sm:$0xff] %vm35, %v82
    // Predicated region
    $region18: #{tpu_custom_call.1} parent=1 // pred_check
      _
    $region19: #{tpu_custom_call.1} parent=1 // pred_check_branch
      %86 = sbr.rel (0) target = $region21
    $region20: #{tpu_custom_call.1} parent=1 // pred_region
      %s88 = ssub.s32 256, 256
      %89 = vsyncadd [#allocation6], %s88
      %s90 = sshll.u32 [#allocation7], 4
      %s91 = int_to_ptr.vmem [resolvable:$true] %s90
      %96 = dma.vmem_to_hbm [thread:$0]  %s91, 256, %s3, [#allocation6], 128, 128, 8
    $region21: #{tpu_custom_call.1} parent=1 // pred_fallthru
      _
    // Predicated region
    $region22: #{tpu_custom_call.1} parent=1 // pred_check
      _
    $region23: #{tpu_custom_call.1} parent=1 // pred_check_branch
      %98 = sbr.rel (0) target = $region25
    $region24: #{tpu_custom_call.1} parent=1 // pred_region
      %99 = dma.done [#allocation6], 256
    $region25: #{tpu_custom_call.1} parent=1 // pred_fallthru
      _
    %100 = vsyncpa [#allocation5], 1
    %101 = vsyncpa [#allocation6], 1

</llo_original>
